<compile_context>
chip_gen: v6e
topology: v6e:2x2x1
jax: 0.10.0
libtpu: 0.0.40
codegen_flags: <defaults>
</compile_context>

<pallas_src>
import jax
import jax.numpy as jnp
from jax.experimental import pallas as pl
from jax.experimental.pallas import tpu as pltpu

LOSS_BIAS = 0.2
LANES = 128
TM_MAX = 1024  # rows per block for large inputs (1024*128*4B = 512 KiB per input tile)


def _make_wll_kernel(tm, num_blocks, rem, needs_mask):
    """Build the per-block kernel.

    Each grid step processes a (tm, 128) tile of yt/yp, computes both loss
    terms, and writes lane-dense (1, 128) partial sums (reduced over the
    sublane axis only).  `rem` is the number of valid elements in the last
    block (static Python int), used to mask zero-padding / out-of-bounds rows.
    """

    def kernel(yt_ref, yp_ref, pos_ref, neg_ref):
        def compute(apply_mask):
            yt = yt_ref[...].astype(jnp.float32)
            yp = yp_ref[...].astype(jnp.float32)
            eps = jnp.float32(1e-07)
            pos = -yt * jnp.log(yp + eps)
            neg = -(jnp.float32(1.0) - yt) * jnp.log(jnp.float32(1.0) - yp + eps)
            if apply_mask:
                rows = jax.lax.broadcasted_iota(jnp.int32, (tm, LANES), 0)
                lanes = jax.lax.broadcasted_iota(jnp.int32, (tm, LANES), 1)
                local_flat = rows * LANES + lanes  # block-local -> no i32 overflow
                valid = local_flat < rem
                pos = jnp.where(valid, pos, 0.0)
                neg = jnp.where(valid, neg, 0.0)
            pos_ref[...] = jnp.sum(pos, axis=0, keepdims=True)
            neg_ref[...] = jnp.sum(neg, axis=0, keepdims=True)

        if not needs_mask:
            compute(False)  # clean problem: no mask work anywhere
        elif num_blocks == 1:
            compute(True)
        else:
            is_last = pl.program_id(0) == num_blocks - 1

            @pl.when(is_last)
            def _():
                compute(True)

            @pl.when(jnp.logical_not(is_last))
            def _():
                compute(False)

    return kernel


def weighted_log_loss(yt: jax.Array, yp: jax.Array) -> jax.Array:
    """Pallas TPU weighted log loss. yt/yp: same shape, any rank. Returns f32 scalar."""
    assert yt.shape == yp.shape, "yt and yp must have the same shape"
    n = int(yt.size)
    assert n > 0

    yt_f = yt.reshape(-1)
    yp_f = yp.reshape(-1)

    pad = (-n) % LANES
    if pad:
        # TODO(synk): ragged lane tail (n % 128 != 0) pays one pad copy; common
        # NCHW-style shapes hit the zero-copy path below.
        yt_f = jnp.pad(yt_f, (0, pad))
        yp_f = jnp.pad(yp_f, (0, pad))
    m_rows = (n + pad) // LANES
    yt2 = yt_f.reshape(m_rows, LANES)
    yp2 = yp_f.reshape(m_rows, LANES)

    if m_rows <= TM_MAX:
        tm = m_rows          # single full-extent block, grid of 1
        num_blocks = 1
    else:
        tm = TM_MAX          # multiple of 8 -> satisfies (8,128) tiling
        num_blocks = (m_rows + tm - 1) // tm

    covered = num_blocks * tm * LANES
    needs_mask = covered != n
    rem = n - (num_blocks - 1) * tm * LANES  # valid elements in the last block

    kernel = _make_wll_kernel(tm, num_blocks, rem, needs_mask)

    pos_part, neg_part = pl.pallas_call(
        kernel,
        out_shape=(
            jax.ShapeDtypeStruct((num_blocks, LANES), jnp.float32),
            jax.ShapeDtypeStruct((num_blocks, LANES), jnp.float32),
        ),
        grid_spec=pltpu.PrefetchScalarGridSpec(
            num_scalar_prefetch=0,
            grid=(num_blocks,),
            in_specs=[
                pl.BlockSpec((tm, LANES), lambda i: (i, 0)),
                pl.BlockSpec((tm, LANES), lambda i: (i, 0)),
            ],
            out_specs=[
                pl.BlockSpec((1, LANES), lambda i: (i, 0)),
                pl.BlockSpec((1, LANES), lambda i: (i, 0)),
            ],
        ),
        compiler_params=pltpu.CompilerParams(
            dimension_semantics=("parallel",),  # independent blocks -> megacore-shardable
        ),
    )(yt2, yp2)

    # Tiny finishing reduction in plain JAX (at most num_blocks x 128 f32 values).
    inv_n = jnp.float32(1.0 / n)
    pos_mean = jnp.sum(pos_part) * inv_n
    neg_mean = jnp.sum(neg_part) * inv_n
    return jnp.float32(LOSS_BIAS) * neg_mean + jnp.float32(1.0 - LOSS_BIAS) * pos_mean


def _reference(yt, yp):
    pos_loss = -yt * jnp.log(yp + 1e-07)
    neg_loss = -(1.0 - yt) * jnp.log(1.0 - yp + 1e-07)
    return LOSS_BIAS * jnp.mean(neg_loss) + (1.0 - LOSS_BIAS) * jnp.mean(pos_loss)


if __name__ == "__main__":
    key = jax.random.PRNGKey(0)
    k1, k2 = jax.random.split(key)

    # NCHW-style segmentation target/prediction pair (small, single-block path).
    shape = (2, 4, 16, 16)
    yt = (jax.random.uniform(k1, shape) > 0.5).astype(jnp.float32)   # binary targets
    yp = jax.random.uniform(k2, shape, minval=0.01, maxval=0.99)     # probabilities

    loss = weighted_log_loss(yt, yp)
    jax.block_until_ready(loss)
    ref = _reference(yt.astype(jnp.float32), yp.astype(jnp.float32))
    assert jnp.allclose(loss, ref, rtol=1e-5, atol=1e-6), (loss, ref)

    # Also exercise the multi-block + ragged-last-block (masked) path.
    k3, k4 = jax.random.split(k2)
    shape2 = (2, 4, 128, 130)  # 133120 elems -> 1040 rows -> 2 blocks, ragged last block
    yt_b = (jax.random.uniform(k3, shape2) > 0.5).astype(jnp.float32)
    yp_b = jax.random.uniform(k4, shape2, minval=0.01, maxval=0.99)
    loss_b = weighted_log_loss(yt_b, yp_b)
    jax.block_until_ready(loss_b)
    ref_b = _reference(yt_b, yp_b)
    assert jnp.allclose(loss_b, ref_b, rtol=1e-4, atol=1e-5), (loss_b, ref_b)

    print("KERNEL_OK")
</pallas_src>

<mosaic_0001>
module attributes {stable_mosaic.version = 11 : i64} {
  func.func @kernel(%arg0: i32, %arg1: memref<16x128xf32, #tpu.memory_space<vmem>>, %arg2: memref<16x128xf32, #tpu.memory_space<vmem>>, %arg3: memref<1x128xf32, #tpu.memory_space<vmem>>, %arg4: memref<1x128xf32, #tpu.memory_space<vmem>>) attributes {dimension_semantics = [#tpu.dimension_semantics<parallel>], iteration_bounds = array<i64: 1>, scalar_prefetch = 0 : i64, scratch_operands = 0 : i64, tpu.core_type = #tpu.core_type<tc>, window_params = [{transform_indices = @transform_0, window_bounds = array<i64: 16, 128>}, {transform_indices = @transform_1, window_bounds = array<i64: 16, 128>}, {transform_indices = @transform_2, window_bounds = array<i64: 1, 128>}, {transform_indices = @transform_3, window_bounds = array<i64: 1, 128>}]} {
    %c0 = arith.constant 0 : index
    %c0_0 = arith.constant 0 : index
    %0 = vector.load %arg1[%c0, %c0_0] : memref<16x128xf32, #tpu.memory_space<vmem>>, vector<16x128xf32>
    %c0_1 = arith.constant 0 : index
    %c0_2 = arith.constant 0 : index
    %1 = vector.load %arg2[%c0_1, %c0_2] : memref<16x128xf32, #tpu.memory_space<vmem>>, vector<16x128xf32>
    %cst = arith.constant 0.000000e+00 : f32
    %2 = vector.broadcast %cst : f32 to vector<16x128xf32>
    %3 = arith.subf %2, %0 : vector<16x128xf32>
    %cst_3 = arith.constant 1.000000e-07 : f32
    %4 = vector.broadcast %cst_3 : f32 to vector<16x128xf32>
    %5 = arith.addf %1, %4 : vector<16x128xf32>
    %6 = math.log %5 : vector<16x128xf32>
    %7 = arith.mulf %3, %6 : vector<16x128xf32>
    %cst_4 = arith.constant 1.000000e+00 : f32
    %8 = vector.broadcast %cst_4 : f32 to vector<16x128xf32>
    %9 = arith.subf %8, %0 : vector<16x128xf32>
    %cst_5 = arith.constant 0.000000e+00 : f32
    %10 = vector.broadcast %cst_5 : f32 to vector<16x128xf32>
    %11 = arith.subf %10, %9 : vector<16x128xf32>
    %cst_6 = arith.constant 1.000000e+00 : f32
    %12 = vector.broadcast %cst_6 : f32 to vector<16x128xf32>
    %13 = arith.subf %12, %1 : vector<16x128xf32>
    %cst_7 = arith.constant 1.000000e-07 : f32
    %14 = vector.broadcast %cst_7 : f32 to vector<16x128xf32>
    %15 = arith.addf %13, %14 : vector<16x128xf32>
    %16 = math.log %15 : vector<16x128xf32>
    %17 = arith.mulf %11, %16 : vector<16x128xf32>
    %cst_8 = arith.constant dense<0.000000e+00> : vector<128xf32>
    %18 = vector.multi_reduction <add>, %7, %cst_8 [0] : vector<16x128xf32> to vector<128xf32>
    %19 = vector.shape_cast %18 : vector<128xf32> to vector<1x128xf32>
    %c0_9 = arith.constant 0 : index
    %c0_10 = arith.constant 0 : index
    %20 = vector.load %arg3[%c0_9, %c0_10] : memref<1x128xf32, #tpu.memory_space<vmem>>, vector<1x128xf32>
    tpu.vector_store %arg3[%c0_9, %c0_10], %19 {strides = array<i32>} : memref<1x128xf32, #tpu.memory_space<vmem>>, vector<1x128xf32>,
    %cst_11 = arith.constant dense<0.000000e+00> : vector<128xf32>
    %21 = vector.multi_reduction <add>, %17, %cst_11 [0] : vector<16x128xf32> to vector<128xf32>
    %22 = vector.shape_cast %21 : vector<128xf32> to vector<1x128xf32>
    %c0_12 = arith.constant 0 : index
    %c0_13 = arith.constant 0 : index
    %23 = vector.load %arg4[%c0_12, %c0_13] : memref<1x128xf32, #tpu.memory_space<vmem>>, vector<1x128xf32>
    tpu.vector_store %arg4[%c0_12, %c0_13], %22 {strides = array<i32>} : memref<1x128xf32, #tpu.memory_space<vmem>>, vector<1x128xf32>,
    return
  }
  func.func @transform_0(%arg0: i32) -> (i32, i32) {
    %c0_i32 = arith.constant 0 : i32
    %c0_i32_0 = arith.constant 0 : i32
    return %arg0, %c0_i32 : i32, i32
  }
  func.func @transform_1(%arg0: i32) -> (i32, i32) {
    %c0_i32 = arith.constant 0 : i32
    %c0_i32_0 = arith.constant 0 : i32
    return %arg0, %c0_i32 : i32, i32
  }
  func.func @transform_2(%arg0: i32) -> (i32, i32) {
    %c0_i32 = arith.constant 0 : i32
    %c0_i32_0 = arith.constant 0 : i32
    return %arg0, %c0_i32 : i32, i32
  }
  func.func @transform_3(%arg0: i32) -> (i32, i32) {
    %c0_i32 = arith.constant 0 : i32
    %c0_i32_0 = arith.constant 0 : i32
    return %arg0, %c0_i32 : i32, i32
  }
}

</mosaic_0001>

<llo_original>
// kernel: tpu_custom_call.1
$region0: #{tpu_custom_call.1}
  #allocation0 [shape = 'u32[]', space=smem, size = 0x4, offset = 0x4, fixed_abs, tag = 'smem constant byte address 0x4 - core index']
  #allocation1 [shape = 'u32[144,128]{1,0:T(1,128)}', space=vmem, size = 0x12000, scoped, tag = 'internal scratch']
  %s0 = inlined_call_operand.hbm [shape: f32[16,128], index: 0, kind: input, shape index: {}]
  %s1 = inlined_call_operand.hbm [shape: f32[16,128], index: 1, kind: input, shape index: {}]
  %s2 = inlined_call_operand.hbm [shape: f32[1,128], index: 2, kind: output, shape index: {0}]
  %s3 = inlined_call_operand.hbm [shape: f32[1,128], index: 3, kind: output, shape index: {1}]
  %4 = xla_tuple %s2, %s3
  %s5 = sld [smem:[#allocation0]]
  $region34: #{tpu_custom_call.1} parent=0
    _
  %s7 = ssub.s32 1, %s5
  %s8 = scalar_select 0, %s7, %s5
  $region1: #{tpu_custom_call.1} parent=0
    #allocation2 [shape = 'u8[8192]{0}', space=vmem, size = 0x2000, scoped, tag = 'input window, operand 0, single buffered']
    #allocation3 [shape = 's32[1]{0}', space=sflag, size = 0x4, scoped, tag = 'scoped memory for tpu_custom_call.1']
    #allocation4 [shape = 's32[1]{0}', space=sflag, size = 0x4, scoped, tag = 'scoped memory for tpu_custom_call.1']
    #allocation5 [shape = 'u8[8192]{0}', space=vmem, size = 0x2000, scoped, tag = 'input window, operand 1, single buffered']
    #allocation6 [shape = 's32[1]{0}', space=sflag, size = 0x4, scoped, tag = 'scoped memory for tpu_custom_call.1']
    #allocation7 [shape = 'u8[512]{0}', space=vmem, size = 0x400, scoped, tag = 'output window, operand 0, single buffered']
    #allocation8 [shape = 'u8[512]{0}', space=vmem, size = 0x400, scoped, tag = 'output window, operand 1, single buffered']
    #allocation9 [shape = 's32[1]{0}', space=sflag, size = 0x4, scoped, tag = 'scoped memory for tpu_custom_call.1']
    %9 = vsyncpa [#allocation3], 0
    %10 = vsyncpa [#allocation6], 0
    %11 = vsyncpa [#allocation4], 0
    %12 = vsyncpa [#allocation9], 0
    // Predicated region
    $region2: #{tpu_custom_call.1} parent=1 // pred_check
      _
    $region3: #{tpu_custom_call.1} parent=1 // pred_check_branch
      %14 = sbr.rel (0) target = $region5
    $region4: #{tpu_custom_call.1} parent=1 // pred_region
      %s16 = ssub.s32 256, 256
      %17 = vsyncadd [#allocation3], %s16
      %s18 = sshll.u32 [#allocation2], 4
      %s19 = int_to_ptr.vmem [resolvable:$true] %s18
      %24 = dma.hbm_to_vmem [thread:$0]  %s0, 256, %s19, [#allocation3], 128, 128, 8
    $region5: #{tpu_custom_call.1} parent=1 // pred_fallthru
      _
    // Predicated region
    $region6: #{tpu_custom_call.1} parent=1 // pred_check
      _
    $region7: #{tpu_custom_call.1} parent=1 // pred_check_branch
      %26 = sbr.rel (0) target = $region9
    $region8: #{tpu_custom_call.1} parent=1 // pred_region
      %s28 = ssub.s32 256, 256
      %29 = vsyncadd [#allocation6], %s28
      %s30 = sshll.u32 [#allocation5], 4
      %s31 = int_to_ptr.vmem [resolvable:$true] %s30
      %36 = dma.hbm_to_vmem [thread:$0]  %s1, 256, %s31, [#allocation6], 128, 128, 8
    $region9: #{tpu_custom_call.1} parent=1 // pred_fallthru
      _
    // Predicated region
    $region10: #{tpu_custom_call.1} parent=1 // pred_check
      _
    $region11: #{tpu_custom_call.1} parent=1 // pred_check_branch
      %38 = sbr.rel (0) target = $region13
    $region12: #{tpu_custom_call.1} parent=1 // pred_region
      %39 = dma.done [#allocation3], 256
    $region13: #{tpu_custom_call.1} parent=1 // pred_fallthru
      _
    // Predicated region
    $region14: #{tpu_custom_call.1} parent=1 // pred_check
      _
    $region15: #{tpu_custom_call.1} parent=1 // pred_check_branch
      %41 = sbr.rel (0) target = $region17
    $region16: #{tpu_custom_call.1} parent=1 // pred_region
      %42 = dma.done [#allocation6], 256
    $region17: #{tpu_custom_call.1} parent=1 // pred_fallthru
      _
    %v43 = vld [vmem:[#allocation2] sm:$0xff]
    %v44 = vld [vmem:[#allocation2 + $0x8] sm:$0xff]
    %v45 = vld [vmem:[#allocation5] sm:$0xff]
    %v46 = vld [vmem:[#allocation5 + $0x8] sm:$0xff]
    %v47 = vsub.f32 0.0, %v43
    %v48 = vsub.f32 0.0, %v44
    %v49 = vadd.f32 %v45, 1e-07
    %v50 = vadd.f32 %v46, 1e-07
    %v51 = vlog2.pop %v49
    %v52 = vmul.f32 %v51, 0.6931472
    %v53 = vlog2.pop %v50
    %v54 = vmul.f32 %v53, 0.6931472
    %v55 = vmul.f32 %v47, %v52
    %v56 = vmul.f32 %v48, %v54
    %v57 = vsub.f32 1.0, %v43
    %v58 = vsub.f32 1.0, %v44
    %v59 = vsub.f32 0.0, %v57
    %v60 = vsub.f32 0.0, %v58
    %v61 = vsub.f32 1.0, %v45
    %v62 = vsub.f32 1.0, %v46
    %v63 = vadd.f32 %v61, 1e-07
    %v64 = vadd.f32 %v62, 1e-07
    %v65 = vlog2.pop %v63
    %v66 = vmul.f32 %v65, 0.6931472
    %v67 = vlog2.pop %v64
    %v68 = vmul.f32 %v67, 0.6931472
    %v69 = vmul.f32 %v59, %v66
    %v70 = vmul.f32 %v60, %v68
    %v71 = vadd.f32 %v55, %v56
    %v72 = vrot.slane %v71, 4
    %v73 = vadd.f32 %v71, %v72
    %v74 = vrot.slane %v73, 2
    %v75 = vadd.f32 %v73, %v74
    %v76 = vrot.slane %v75, 1
    %v77 = vadd.f32 %v75, %v76
    %78 = vst [vmem:[#allocation7] sm:$0x1] %v77
    %v79 = vadd.f32 %v69, %v70
    %v80 = vrot.slane %v79, 4
    %v81 = vadd.f32 %v79, %v80
    %v82 = vrot.slane %v81, 2
    %v83 = vadd.f32 %v81, %v82
    %v84 = vrot.slane %v83, 1
    %v85 = vadd.f32 %v83, %v84
    %86 = vst [vmem:[#allocation8] sm:$0x1] %v85
    // Predicated region
    $region18: #{tpu_custom_call.1} parent=1 // pred_check
      _
    $region19: #{tpu_custom_call.1} parent=1 // pred_check_branch
      %88 = sbr.rel (0) target = $region21
    $region20: #{tpu_custom_call.1} parent=1 // pred_region
      %s90 = ssub.s32 16, 16
      %91 = vsyncadd [#allocation4], %s90
      %s93 = sshll.u32 [#allocation7], 4
      %s94 = int_to_ptr.vmem [resolvable:$true] %s93
      %96 = dma.vmem_to_hbm [thread:$0]  %s94, 16, %s2, [#allocation4]
    $region21: #{tpu_custom_call.1} parent=1 // pred_fallthru
      _
    // Predicated region
    $region22: #{tpu_custom_call.1} parent=1 // pred_check
      _
    $region23: #{tpu_custom_call.1} parent=1 // pred_check_branch
      %98 = sbr.rel (0) target = $region25
    $region24: #{tpu_custom_call.1} parent=1 // pred_region
      %s100 = ssub.s32 16, 16
      %101 = vsyncadd [#allocation9], %s100
      %s103 = sshll.u32 [#allocation8], 4
      %s104 = int_to_ptr.vmem [resolvable:$true] %s103
      %106 = dma.vmem_to_hbm [thread:$0]  %s104, 16, %s3, [#allocation9]
    $region25: #{tpu_custom_call.1} parent=1 // pred_fallthru
      _
    // Predicated region
    $region26: #{tpu_custom_call.1} parent=1 // pred_check
      _
    $region27: #{tpu_custom_call.1} parent=1 // pred_check_branch
      %108 = sbr.rel (0) target = $region29
    $region28: #{tpu_custom_call.1} parent=1 // pred_region
      %109 = dma.done [#allocation4], 16
    $region29: #{tpu_custom_call.1} parent=1 // pred_fallthru
      _
    // Predicated region
    $region30: #{tpu_custom_call.1} parent=1 // pred_check
      _
    $region31: #{tpu_custom_call.1} parent=1 // pred_check_branch
      %111 = sbr.rel (0) target = $region33
    $region32: #{tpu_custom_call.1} parent=1 // pred_region
      %112 = dma.done [#allocation9], 16
    $region33: #{tpu_custom_call.1} parent=1 // pred_fallthru
      _
    %113 = vsyncpa [#allocation3], 1
    %114 = vsyncpa [#allocation6], 1
    %115 = vsyncpa [#allocation4], 1
    %116 = vsyncpa [#allocation9], 1

</llo_original>
